<compile_context>
chip_gen: v5e
topology: v5e:2x2
jax: 0.10.0
libtpu: 0.0.40
codegen_flags: <defaults>
</compile_context>

<pallas_src>
import numpy as np
import jax
import jax.numpy as jnp
from jax.experimental import pallas as pl
from jax.experimental.pallas import tpu as pltpu


# ----------------------------------------------------------------------------
# Configuration (mirrors LagrangeKANNmaninner.__init__ arguments)
# ----------------------------------------------------------------------------
N_WIDTH = 8
N_ORDER = 4
N_ELEMENTS = 4
N_NODES = N_ELEMENTS * N_ORDER + 1          # 17
N_COLLOCATION = 8
N_SAMPLES = 8
X_MIN = 0.0
X_MAX = 1.0
DELTA_X = 0.5 * N_ORDER * (X_MAX - X_MIN) / (N_NODES - 1)


# ----------------------------------------------------------------------------
# Lagrange basis (plain JAX setup — static small loops over n_order, vectorized
# over all collocation samples at once)
# ----------------------------------------------------------------------------
def lagrange(x, n_order):
    nodes = np.linspace(-1.0, 1.0, n_order + 1)
    cols = []
    for j in range(n_order + 1):
        p = jnp.ones_like(x)
        for m in range(n_order + 1):
            if j != m:
                p = p * (x - nodes[m]) / (nodes[j] - nodes[m])
        cols.append(p)
    return jnp.stack(cols, axis=-1)


def dlagrange(x, n_order):
    nodes = np.linspace(-1.0, 1.0, n_order + 1)
    cols = []
    for j in range(n_order + 1):
        y = jnp.zeros_like(x)
        for i in range(n_order + 1):
            if i != j:
                k = jnp.ones_like(x) / (nodes[j] - nodes[i])
                for m in range(n_order + 1):
                    if m != i and m != j:
                        k = k * (x - nodes[m]) / (nodes[j] - nodes[m])
                y = y + k
        cols.append(y)
    return jnp.stack(cols, axis=-1)


def ddlagrange(x, n_order):
    nodes = np.linspace(-1.0, 1.0, n_order + 1)
    cols = []
    for j in range(n_order + 1):
        y = jnp.zeros_like(x)
        for i in range(n_order + 1):
            if i != j:
                k_sum = jnp.zeros_like(x)
                for m in range(n_order + 1):
                    if m != i and m != j:
                        k_prod = jnp.ones_like(x) / (nodes[j] - nodes[m])
                        for n in range(n_order + 1):
                            if n != i and n != j and n != m:
                                k_prod = k_prod * (x - nodes[n]) / (nodes[j] - nodes[n])
                        k_sum = k_sum + k_prod
                y = y + (1.0 / (nodes[j] - nodes[i])) * k_sum
        cols.append(y)
    return jnp.stack(cols, axis=-1)


def _local_basis(x_batch):
    """x_batch: (C,) -> local basis (C, 3, W, O+1) f32, left nodes (C, W) int32."""
    c = x_batch.shape[0]
    x2 = jnp.broadcast_to(x_batch[:, None], (c, N_WIDTH))           # (C, W)
    x_shift = (N_NODES - 1) * (x2 - X_MIN) / (X_MAX - X_MIN)
    id_el = jnp.clip(jnp.floor(x_shift / N_ORDER), 0.0, N_ELEMENTS - 1)
    nodes_l = (id_el * N_ORDER).astype(jnp.int32)                   # (C, W)
    nodes_r = nodes_l + N_ORDER
    x_t = (x_shift - 0.5 * (nodes_l + nodes_r)) / (0.5 * (nodes_r - nodes_l))

    phi = lagrange(x_t, N_ORDER)                                    # (C, W, O+1)
    dphi = dlagrange(x_t, N_ORDER) / DELTA_X
    ddphi = ddlagrange(x_t, N_ORDER) / (DELTA_X ** 2)
    local = jnp.stack([phi, dphi, ddphi], axis=1).astype(jnp.float32)  # (C,3,W,O+1)
    return local, nodes_l


# ----------------------------------------------------------------------------
# Pallas kernels
# ----------------------------------------------------------------------------
def _kann_build_reduce_kernel(nodes_ref, w_ref, local_ref, out_ref, state_ref):
    """it==0 path: in-kernel scatter of the local basis + weighted reduction.

    nodes_ref : (1, W)       int32 left node index per width channel (this sample)
    w_ref     : (W, P)       f32   weights (same block every grid step)
    local_ref : (3, W, O+1)  f32   stacked phi/dphi/ddphi local basis
    out_ref   : (3, W)       f32   [t_ik; dt_ik; ddt_ik] for this sample
    state_ref : (3, W, P)    f32   scattered global-node basis tables
    """
    nodes = nodes_ref[...]                                           # (1, W)
    local = local_ref[...]                                           # (3, W, O+1)
    w = w_ref[...]                                                   # (W, P)

    p_idx = jax.lax.broadcasted_iota(jnp.int32, (1, N_WIDTH, N_NODES), 2)
    base = nodes[:, :, None]                                         # (1, W, 1)

    # Scatter via one-hot masks (VPU compare + multiply-add, no data-dependent
    # memory ops).  Exact placement: values are multiplied by 1.0 / added to 0.0.
    state = jnp.zeros((3, N_WIDTH, N_NODES), jnp.float32)
    for n in range(N_ORDER + 1):                                     # static, 5 iters
        onehot = (p_idx == base + n).astype(jnp.float32)             # (1, W, P)
        state = state + onehot * local[:, :, n][:, :, None]          # (3, W, P)

    state_ref[...] = state
    # einsum('kp, kp -> k') for the 3 stacked tables: VPU multiply + lane reduce.
    out_ref[...] = jnp.sum(w[None, :, :] * state, axis=-1)           # (3, W)


def _kann_reduce_kernel(w_ref, state_ref, out_ref):
    """it!=0 path: weighted reduction over the persisted basis tables."""
    out_ref[...] = jnp.sum(w_ref[...][None, :, :] * state_ref[...], axis=-1)


# ----------------------------------------------------------------------------
# Wrappers (batched over all collocation samples)
# ----------------------------------------------------------------------------
@jax.jit
def kann_build_and_reduce(weight, x_batch):
    """it==0 forward for ALL collocation samples in one gridded pallas_call."""
    c = N_COLLOCATION
    local, nodes_l = _local_basis(x_batch)
    nodes_in = nodes_l[:, None, :]                                   # (C, 1, W) int32

    out, state = pl.pallas_call(
        _kann_build_reduce_kernel,
        grid=(c,),
        in_specs=[
            pl.BlockSpec((None, 1, N_WIDTH), lambda i: (i, 0, 0)),
            pl.BlockSpec((N_WIDTH, N_NODES), lambda i: (0, 0)),
            pl.BlockSpec((None, 3, N_WIDTH, N_ORDER + 1), lambda i: (i, 0, 0, 0)),
        ],
        out_specs=(
            pl.BlockSpec((None, 3, N_WIDTH), lambda i: (i, 0, 0)),
            pl.BlockSpec((None, 3, N_WIDTH, N_NODES), lambda i: (i, 0, 0, 0)),
        ),
        out_shape=(
            jax.ShapeDtypeStruct((c, 3, N_WIDTH), jnp.float32),
            jax.ShapeDtypeStruct((c, 3, N_WIDTH, N_NODES), jnp.float32),
        ),
        compiler_params=pltpu.CompilerParams(dimension_semantics=("parallel",)),
    )(nodes_in, weight, local)

    return {
        "t_ik": out[:, 0, :],          # row c == torch t_ik for sample c (shape (1,W))
        "dt_ik": out[:, 1, :],
        "ddt_ik": out[:, 2, :],
        "phi_ikp": state[:, 0],        # (C, W, P) persisted basis tables
        "dphi_ikp": state[:, 1],
        "ddphi_ikp": state[:, 2],
        "delta_x": DELTA_X,
    }


@jax.jit
def kann_reduce_batch(weight, phi_ikp, dphi_ikp, ddphi_ikp):
    """it!=0 forward: reduction over persisted basis tables, all samples at once."""
    c = phi_ikp.shape[0]
    state = jnp.stack([phi_ikp, dphi_ikp, ddphi_ikp], axis=1)        # (C, 3, W, P)
    out = pl.pallas_call(
        _kann_reduce_kernel,
        grid=(c,),
        in_specs=[
            pl.BlockSpec((N_WIDTH, N_NODES), lambda i: (0, 0)),
            pl.BlockSpec((None, 3, N_WIDTH, N_NODES), lambda i: (i, 0, 0, 0)),
        ],
        out_specs=pl.BlockSpec((None, 3, N_WIDTH), lambda i: (i, 0, 0)),
        out_shape=jax.ShapeDtypeStruct((c, 3, N_WIDTH), jnp.float32),
        compiler_params=pltpu.CompilerParams(dimension_semantics=("parallel",)),
    )(weight, state)
    return out[:, 0, :], out[:, 1, :], out[:, 2, :]


# ----------------------------------------------------------------------------
# Main
# ----------------------------------------------------------------------------
if __name__ == "__main__":
    key = jax.random.PRNGKey(0)
    k_w, k_x = jax.random.split(key)

    # Module __init__ uses zeros for the weight; use deterministic random values
    # instead so the kernel output is non-trivial.
    weight = jax.random.normal(k_w, (N_WIDTH, N_NODES), dtype=jnp.float32)
    x_batch = jax.random.uniform(k_x, (N_COLLOCATION,), dtype=jnp.float32,
                                 minval=X_MIN, maxval=X_MAX)

    out = kann_build_and_reduce(weight, x_batch)
    jax.block_until_ready(out)

    # ---- plain-JAX reference (it==0 path of the torch module, per sample) ----
    local_ref, nodes_l_ref = _local_basis(x_batch)
    c_idx = jnp.arange(N_COLLOCATION)[:, None, None, None]
    s_idx = jnp.arange(3)[None, :, None, None]
    k_idx = jnp.arange(N_WIDTH)[None, None, :, None]
    p_idx = (nodes_l_ref[:, None, :, None]
             + jnp.arange(N_ORDER + 1)[None, None, None, :])
    state_ref = jnp.zeros((N_COLLOCATION, 3, N_WIDTH, N_NODES), jnp.float32)
    state_ref = state_ref.at[c_idx, s_idx, k_idx, p_idx].set(local_ref)
    phi_ref, dphi_ref, ddphi_ref = state_ref[:, 0], state_ref[:, 1], state_ref[:, 2]

    t_ref = jnp.einsum("kp,ckp->ck", weight, phi_ref)
    dt_ref = jnp.einsum("kp,ckp->ck", weight, dphi_ref)
    ddt_ref = jnp.einsum("kp,ckp->ck", weight, ddphi_ref)

    assert out["t_ik"].shape == (N_COLLOCATION, N_WIDTH)
    assert jnp.allclose(out["phi_ikp"], phi_ref, atol=1e-6)
    assert jnp.allclose(out["dphi_ikp"], dphi_ref, atol=1e-5)
    assert jnp.allclose(out["ddphi_ikp"], ddphi_ref, atol=1e-4)
    assert jnp.allclose(out["t_ik"], t_ref, atol=1e-5)
    assert jnp.allclose(out["dt_ik"], dt_ref, atol=1e-4)
    assert jnp.allclose(out["ddt_ik"], ddt_ref, atol=1e-3)

    # ---- it != 0 path: reduce-only kernel over the persisted basis tables ----
    t2, dt2, ddt2 = kann_reduce_batch(weight, out["phi_ikp"],
                                      out["dphi_ikp"], out["ddphi_ikp"])
    jax.block_until_ready(t2)
    assert jnp.allclose(t2, out["t_ik"], atol=1e-5)
    assert jnp.allclose(dt2, out["dt_ik"], atol=1e-4)
    assert jnp.allclose(ddt2, out["ddt_ik"], atol=1e-3)

    print("KERNEL_OK")
</pallas_src>

<mosaic_0001>
module attributes {stable_mosaic.version = 11 : i64} {
  func.func @_kann_build_reduce_kernel(%arg0: i32, %arg1: memref<1x1x8xi32, #tpu.memory_space<vmem>>, %arg2: memref<8x17xf32, #tpu.memory_space<vmem>>, %arg3: memref<1x3x8x5xf32, #tpu.memory_space<vmem>>, %arg4: memref<1x3x8xf32, #tpu.memory_space<vmem>>, %arg5: memref<1x3x8x17xf32, #tpu.memory_space<vmem>>) attributes {dimension_semantics = [#tpu.dimension_semantics<parallel>], iteration_bounds = array<i64: 8>, scalar_prefetch = 0 : i64, scratch_operands = 0 : i64, tpu.core_type = #tpu.core_type<tc>, window_params = [{transform_indices = @transform_0, window_bounds = array<i64: 1, 1, 8>}, {pipeline_mode = #tpu.pipeline_mode<synchronous>, transform_indices = @transform_1, window_bounds = array<i64: 8, 17>}, {transform_indices = @transform_2, window_bounds = array<i64: 1, 3, 8, 5>}, {transform_indices = @transform_3, window_bounds = array<i64: 1, 3, 8>}, {transform_indices = @transform_4, window_bounds = array<i64: 1, 3, 8, 17>}]} {
    %c0 = arith.constant 0 : index
    %c0_0 = arith.constant 0 : index
    %c0_1 = arith.constant 0 : index
    %0 = vector.load %arg1[%c0, %c0_0, %c0_1] : memref<1x1x8xi32, #tpu.memory_space<vmem>>, vector<1x1x8xi32>
    %1 = vector.shape_cast %0 : vector<1x1x8xi32> to vector<1x8xi32>
    %c0_2 = arith.constant 0 : index
    %c0_3 = arith.constant 0 : index
    %c0_4 = arith.constant 0 : index
    %c0_5 = arith.constant 0 : index
    %2 = vector.load %arg3[%c0_2, %c0_3, %c0_4, %c0_5] : memref<1x3x8x5xf32, #tpu.memory_space<vmem>>, vector<1x3x8x5xf32>
    %3 = vector.shape_cast %2 : vector<1x3x8x5xf32> to vector<3x8x5xf32>
    %c0_6 = arith.constant 0 : index
    %c0_7 = arith.constant 0 : index
    %4 = vector.load %arg2[%c0_6, %c0_7] : memref<8x17xf32, #tpu.memory_space<vmem>>, vector<8x17xf32>
    %5 = tpu.iota {dimensions = array<i32: 2>} : vector<1x8x17xi32>
    %6 = vector.shape_cast %1 : vector<1x8xi32> to vector<1x8x1xi32>
    %cst = arith.constant 0.000000e+00 : f32
    %7 = vector.broadcast %cst : f32 to vector<3x8x17xf32>
    %c0_i32 = arith.constant 0 : i32
    %8 = vector.broadcast %c0_i32 : i32 to vector<1x8x1xi32>
    %9 = arith.addi %6, %8 : vector<1x8x1xi32>
    %10 = vector.broadcast %9 : vector<1x8x1xi32> to vector<1x8x17xi32>
    %11 = arith.cmpi eq, %5, %10 : vector<1x8x17xi32>
    %12 = arith.extui %11 : vector<1x8x17xi1> to vector<1x8x17xi32>
    %13 = arith.sitofp %12 : vector<1x8x17xi32> to vector<1x8x17xf32>
    %14 = vector.extract_strided_slice %3 {offsets = [0, 0, 0], sizes = [3, 8, 1], strides = [1, 1, 1]} : vector<3x8x5xf32> to vector<3x8x1xf32>
    %15 = vector.shape_cast %14 : vector<3x8x1xf32> to vector<3x8xf32>
    %16 = vector.shape_cast %15 : vector<3x8xf32> to vector<3x8x1xf32>
    %17 = vector.broadcast %13 : vector<1x8x17xf32> to vector<3x8x17xf32>
    %18 = vector.broadcast %16 : vector<3x8x1xf32> to vector<3x8x17xf32>
    %19 = arith.mulf %17, %18 : vector<3x8x17xf32>
    %20 = arith.addf %7, %19 : vector<3x8x17xf32>
    %c1_i32 = arith.constant 1 : i32
    %21 = vector.broadcast %c1_i32 : i32 to vector<1x8x1xi32>
    %22 = arith.addi %6, %21 : vector<1x8x1xi32>
    %23 = vector.broadcast %22 : vector<1x8x1xi32> to vector<1x8x17xi32>
    %24 = arith.cmpi eq, %5, %23 : vector<1x8x17xi32>
    %25 = arith.extui %24 : vector<1x8x17xi1> to vector<1x8x17xi32>
    %26 = arith.sitofp %25 : vector<1x8x17xi32> to vector<1x8x17xf32>
    %27 = vector.extract_strided_slice %3 {offsets = [0, 0, 1], sizes = [3, 8, 1], strides = [1, 1, 1]} : vector<3x8x5xf32> to vector<3x8x1xf32>
    %28 = vector.shape_cast %27 : vector<3x8x1xf32> to vector<3x8xf32>
    %29 = vector.shape_cast %28 : vector<3x8xf32> to vector<3x8x1xf32>
    %30 = vector.broadcast %26 : vector<1x8x17xf32> to vector<3x8x17xf32>
    %31 = vector.broadcast %29 : vector<3x8x1xf32> to vector<3x8x17xf32>
    %32 = arith.mulf %30, %31 : vector<3x8x17xf32>
    %33 = arith.addf %20, %32 : vector<3x8x17xf32>
    %c2_i32 = arith.constant 2 : i32
    %34 = vector.broadcast %c2_i32 : i32 to vector<1x8x1xi32>
    %35 = arith.addi %6, %34 : vector<1x8x1xi32>
    %36 = vector.broadcast %35 : vector<1x8x1xi32> to vector<1x8x17xi32>
    %37 = arith.cmpi eq, %5, %36 : vector<1x8x17xi32>
    %38 = arith.extui %37 : vector<1x8x17xi1> to vector<1x8x17xi32>
    %39 = arith.sitofp %38 : vector<1x8x17xi32> to vector<1x8x17xf32>
    %40 = vector.extract_strided_slice %3 {offsets = [0, 0, 2], sizes = [3, 8, 1], strides = [1, 1, 1]} : vector<3x8x5xf32> to vector<3x8x1xf32>
    %41 = vector.shape_cast %40 : vector<3x8x1xf32> to vector<3x8xf32>
    %42 = vector.shape_cast %41 : vector<3x8xf32> to vector<3x8x1xf32>
    %43 = vector.broadcast %39 : vector<1x8x17xf32> to vector<3x8x17xf32>
    %44 = vector.broadcast %42 : vector<3x8x1xf32> to vector<3x8x17xf32>
    %45 = arith.mulf %43, %44 : vector<3x8x17xf32>
    %46 = arith.addf %33, %45 : vector<3x8x17xf32>
    %c3_i32 = arith.constant 3 : i32
    %47 = vector.broadcast %c3_i32 : i32 to vector<1x8x1xi32>
    %48 = arith.addi %6, %47 : vector<1x8x1xi32>
    %49 = vector.broadcast %48 : vector<1x8x1xi32> to vector<1x8x17xi32>
    %50 = arith.cmpi eq, %5, %49 : vector<1x8x17xi32>
    %51 = arith.extui %50 : vector<1x8x17xi1> to vector<1x8x17xi32>
    %52 = arith.sitofp %51 : vector<1x8x17xi32> to vector<1x8x17xf32>
    %53 = vector.extract_strided_slice %3 {offsets = [0, 0, 3], sizes = [3, 8, 1], strides = [1, 1, 1]} : vector<3x8x5xf32> to vector<3x8x1xf32>
    %54 = vector.shape_cast %53 : vector<3x8x1xf32> to vector<3x8xf32>
    %55 = vector.shape_cast %54 : vector<3x8xf32> to vector<3x8x1xf32>
    %56 = vector.broadcast %52 : vector<1x8x17xf32> to vector<3x8x17xf32>
    %57 = vector.broadcast %55 : vector<3x8x1xf32> to vector<3x8x17xf32>
    %58 = arith.mulf %56, %57 : vector<3x8x17xf32>
    %59 = arith.addf %46, %58 : vector<3x8x17xf32>
    %c4_i32 = arith.constant 4 : i32
    %60 = vector.broadcast %c4_i32 : i32 to vector<1x8x1xi32>
    %61 = arith.addi %6, %60 : vector<1x8x1xi32>
    %62 = vector.broadcast %61 : vector<1x8x1xi32> to vector<1x8x17xi32>
    %63 = arith.cmpi eq, %5, %62 : vector<1x8x17xi32>
    %64 = arith.extui %63 : vector<1x8x17xi1> to vector<1x8x17xi32>
    %65 = arith.sitofp %64 : vector<1x8x17xi32> to vector<1x8x17xf32>
    %66 = vector.extract_strided_slice %3 {offsets = [0, 0, 4], sizes = [3, 8, 1], strides = [1, 1, 1]} : vector<3x8x5xf32> to vector<3x8x1xf32>
    %67 = vector.shape_cast %66 : vector<3x8x1xf32> to vector<3x8xf32>
    %68 = vector.shape_cast %67 : vector<3x8xf32> to vector<3x8x1xf32>
    %69 = vector.broadcast %65 : vector<1x8x17xf32> to vector<3x8x17xf32>
    %70 = vector.broadcast %68 : vector<3x8x1xf32> to vector<3x8x17xf32>
    %71 = arith.mulf %69, %70 : vector<3x8x17xf32>
    %72 = arith.addf %59, %71 : vector<3x8x17xf32>
    %c0_8 = arith.constant 0 : index
    %c0_9 = arith.constant 0 : index
    %c0_10 = arith.constant 0 : index
    %c0_11 = arith.constant 0 : index
    %73 = vector.load %arg5[%c0_8, %c0_9, %c0_10, %c0_11] : memref<1x3x8x17xf32, #tpu.memory_space<vmem>>, vector<1x3x8x17xf32>
    %74 = vector.shape_cast %73 : vector<1x3x8x17xf32> to vector<3x8x17xf32>
    %75 = vector.shape_cast %72 : vector<3x8x17xf32> to vector<1x3x8x17xf32>
    tpu.vector_store %arg5[%c0_8, %c0_9, %c0_10, %c0_11], %75 {strides = array<i32>} : memref<1x3x8x17xf32, #tpu.memory_space<vmem>>, vector<1x3x8x17xf32>,
    %76 = vector.shape_cast %4 : vector<8x17xf32> to vector<1x8x17xf32>
    %77 = vector.broadcast %76 : vector<1x8x17xf32> to vector<3x8x17xf32>
    %78 = arith.mulf %77, %72 : vector<3x8x17xf32>
    %cst_12 = arith.constant dense<0.000000e+00> : vector<3x8xf32>
    %79 = vector.multi_reduction <add>, %78, %cst_12 [2] : vector<3x8x17xf32> to vector<3x8xf32>
    %c0_13 = arith.constant 0 : index
    %c0_14 = arith.constant 0 : index
    %c0_15 = arith.constant 0 : index
    %80 = vector.load %arg4[%c0_13, %c0_14, %c0_15] : memref<1x3x8xf32, #tpu.memory_space<vmem>>, vector<1x3x8xf32>
    %81 = vector.shape_cast %80 : vector<1x3x8xf32> to vector<3x8xf32>
    %82 = vector.shape_cast %79 : vector<3x8xf32> to vector<1x3x8xf32>
    tpu.vector_store %arg4[%c0_13, %c0_14, %c0_15], %82 {strides = array<i32>} : memref<1x3x8xf32, #tpu.memory_space<vmem>>, vector<1x3x8xf32>,
    return
  }
  func.func @transform_0(%arg0: i32) -> (i32, i32, i32) {
    %c0_i32 = arith.constant 0 : i32
    %c0_i32_0 = arith.constant 0 : i32
    %c0_i32_1 = arith.constant 0 : i32
    return %arg0, %c0_i32, %c0_i32_0 : i32, i32, i32
  }
  func.func @transform_1(%arg0: i32) -> (i32, i32) {
    %c0_i32 = arith.constant 0 : i32
    %c0_i32_0 = arith.constant 0 : i32
    %c0_i32_1 = arith.constant 0 : i32
    return %c0_i32, %c0_i32_0 : i32, i32
  }
  func.func @transform_2(%arg0: i32) -> (i32, i32, i32, i32) {
    %c0_i32 = arith.constant 0 : i32
    %c0_i32_0 = arith.constant 0 : i32
    %c0_i32_1 = arith.constant 0 : i32
    %c0_i32_2 = arith.constant 0 : i32
    return %arg0, %c0_i32, %c0_i32_0, %c0_i32_1 : i32, i32, i32, i32
  }
  func.func @transform_3(%arg0: i32) -> (i32, i32, i32) {
    %c0_i32 = arith.constant 0 : i32
    %c0_i32_0 = arith.constant 0 : i32
    %c0_i32_1 = arith.constant 0 : i32
    return %arg0, %c0_i32, %c0_i32_0 : i32, i32, i32
  }
  func.func @transform_4(%arg0: i32) -> (i32, i32, i32, i32) {
    %c0_i32 = arith.constant 0 : i32
    %c0_i32_0 = arith.constant 0 : i32
    %c0_i32_1 = arith.constant 0 : i32
    %c0_i32_2 = arith.constant 0 : i32
    return %arg0, %c0_i32, %c0_i32_0, %c0_i32_1 : i32, i32, i32, i32
  }
}

</mosaic_0001>

<llo_original>
// kernel: kann_build_and_reduce.1
$region0: #{kann_build_and_reduce.1}
  #allocation0 [shape = 'u32[]', space=smem, size = 0x4, offset = 0x4, fixed_abs, tag = 'smem constant byte address 0x4 - core index']
  #allocation1 [shape = 'u32[72,128]{1,0:T(1,128)}', space=vmem, size = 0x9000, scoped, tag = 'internal scratch']
  %s0 = inlined_call_operand.vmem [shape: s32[8,1,8], index: 0, kind: input, shape index: {}]
  %s1 = inlined_call_operand.vmem [shape: f32[8,17], index: 1, kind: input, shape index: {}]
  %s2 = inlined_call_operand.vmem [shape: f32[8,3,8,5], index: 2, kind: input, shape index: {}]
  %s3 = inlined_call_operand.vmem [shape: f32[8,3,8], index: 3, kind: output, shape index: {0}]
  %s4 = inlined_call_operand.vmem [shape: f32[8,3,8,17], index: 4, kind: output, shape index: {1}]
  %5 = xla_tuple %s3, %s4
  %s6 = sld [smem:[#allocation0]]
  $region53: #{kann_build_and_reduce.1} parent=0
    _
  %s8 = ssub.s32 1, %s6
  %s9 = scalar_select 0, %s8, %s6
  loop: start=0, step=1, limit=10
  $region2: #{kann_build_and_reduce.1} parent=0 // loop_pre_header
    _
  $region3: #{kann_build_and_reduce.1} parent=0 // loop_header
    %s11 = sphi 0, %s15
    %p12 = scmp.ge.s32.totalorder %s11, 10
    %s21 = sphi 0, %s23
    %s24 = sphi 0, %s21
    %s25 = sphi 0, %s24
    %s41 = sphi 0, %s25
    %s45 = sphi 0, %s45
    %s47 = sphi 0, %s45
    %s48 = sphi 0, %s47
    %s62 = sphi 0, %s48
    %s68 = sphi 0, %s70
    %s71 = sphi 0, %s68
    %s72 = sphi 0, %s71
    %s88 = sphi 0, %s72
    %s94 = sphi 0, %s96
    %s97 = sphi 0, %s94
    %s98 = sphi 0, %s97
    %s114 = sphi 0, %s98
    %s120 = sphi 0, %s122
    %s123 = sphi 0, %s120
    %s124 = sphi 0, %s123
    %s140 = sphi 0, %s124
  $region4: #{kann_build_and_reduce.1} parent=0 // loop_header_branch
    %14 = sbr.rel (%p12) target = $region8
  $region5: #{kann_build_and_reduce.1} parent=0 // loop_body
    %s16 = ssub.s32 %s11, 1
    %s17 = ssub.s32 %s11, 2
    %s18 = sadd.s32 %s11, 1
    %s19 = ssub.s32 %s11, %s18
    %p20 = scmp.eq.s32.totalorder %s19, 0
    %s22 = sadd.s32 %s21, 1
    %s23 = scalar_select %p20, %s21, %s22
    %p26 = pneg %p20
    %p27 = scmp.eq.s32.totalorder %s11, 7
    %p28 = por %p26, %p27
    %p29 = scmp.ne.s32.totalorder %s21, %s24
    %p30 = scmp.eq.s32.totalorder %s11, 0
    %p31 = por %p29, %p30
    %p32 = scmp.ne.s32.totalorder %s21, %s24
    %p33 = scmp.eq.s32.totalorder %s16, 7
    %p34 = por %p32, %p33
    %p35 = scmp.ne.s32.totalorder %s24, %s25
    %p36 = scmp.eq.s32.totalorder %s16, 0
    %p37 = por %p35, %p36
    %p38 = scmp.ne.s32.totalorder %s24, %s25
    %p39 = scmp.eq.s32.totalorder %s17, 7
    %p40 = por %p38, %p39
    %p42 = scmp.ne.s32.totalorder %s25, %s41
    %p43 = scmp.eq.s32.totalorder %s17, 0
    %p44 = por %p42, %p43
    %s46 = sadd.s32 %s45, 1
    %p49 = scmp.eq.s32.totalorder %s11, 7
    %p50 = scmp.ne.s32.totalorder %s45, %s47
    %p51 = scmp.eq.s32.totalorder %s11, 0
    %p52 = por %p50, %p51
    %p53 = scmp.ne.s32.totalorder %s45, %s47
    %p54 = scmp.eq.s32.totalorder %s16, 7
    %p55 = por %p53, %p54
    %p56 = scmp.ne.s32.totalorder %s47, %s48
    %p57 = scmp.eq.s32.totalorder %s16, 0
    %p58 = por %p56, %p57
    %p59 = scmp.ne.s32.totalorder %s47, %s48
    %p60 = scmp.eq.s32.totalorder %s17, 7
    %p61 = por %p59, %p60
    %p63 = scmp.ne.s32.totalorder %s48, %s62
    %p64 = scmp.eq.s32.totalorder %s17, 0
    %p65 = por %p63, %p64
    %s66 = ssub.s32 %s11, %s18
    %p67 = scmp.eq.s32.totalorder %s66, 0
    %s69 = sadd.s32 %s68, 1
    %s70 = scalar_select %p67, %s68, %s69
    %p73 = pneg %p67
    %p74 = scmp.eq.s32.totalorder %s11, 7
    %p75 = por %p73, %p74
    %p76 = scmp.ne.s32.totalorder %s68, %s71
    %p77 = scmp.eq.s32.totalorder %s11, 0
    %p78 = por %p76, %p77
    %p79 = scmp.ne.s32.totalorder %s68, %s71
    %p80 = scmp.eq.s32.totalorder %s16, 7
    %p81 = por %p79, %p80
    %p82 = scmp.ne.s32.totalorder %s71, %s72
    %p83 = scmp.eq.s32.totalorder %s16, 0
    %p84 = por %p82, %p83
    %p85 = scmp.ne.s32.totalorder %s71, %s72
    %p86 = scmp.eq.s32.totalorder %s17, 7
    %p87 = por %p85, %p86
    %p89 = scmp.ne.s32.totalorder %s72, %s88
    %p90 = scmp.eq.s32.totalorder %s17, 0
    %p91 = por %p89, %p90
    %s92 = ssub.s32 %s11, %s18
    %p93 = scmp.eq.s32.totalorder %s92, 0
    %s95 = sadd.s32 %s94, 1
    %s96 = scalar_select %p93, %s94, %s95
    %p99 = pneg %p93
    %p100 = scmp.eq.s32.totalorder %s11, 7
    %p101 = por %p99, %p100
    %p102 = scmp.ne.s32.totalorder %s94, %s97
    %p103 = scmp.eq.s32.totalorder %s11, 0
    %p104 = por %p102, %p103
    %p105 = scmp.ne.s32.totalorder %s94, %s97
    %p106 = scmp.eq.s32.totalorder %s16, 7
    %p107 = por %p105, %p106
    %p108 = scmp.ne.s32.totalorder %s97, %s98
    %p109 = scmp.eq.s32.totalorder %s16, 0
    %p110 = por %p108, %p109
    %p111 = scmp.ne.s32.totalorder %s97, %s98
    %p112 = scmp.eq.s32.totalorder %s17, 7
    %p113 = por %p111, %p112
    %p115 = scmp.ne.s32.totalorder %s98, %s114
    %p116 = scmp.eq.s32.totalorder %s17, 0
    %p117 = por %p115, %p116
    %s118 = ssub.s32 %s11, %s18
    %p119 = scmp.eq.s32.totalorder %s118, 0
    %s121 = sadd.s32 %s120, 1
    %s122 = scalar_select %p119, %s120, %s121
    %p125 = pneg %p119
    %p126 = scmp.eq.s32.totalorder %s11, 7
    %p127 = por %p125, %p126
    %p128 = scmp.ne.s32.totalorder %s120, %s123
    %p129 = scmp.eq.s32.totalorder %s11, 0
    %p130 = por %p128, %p129
    %p131 = scmp.ne.s32.totalorder %s120, %s123
    %p132 = scmp.eq.s32.totalorder %s16, 7
    %p133 = por %p131, %p132
    %p134 = scmp.ne.s32.totalorder %s123, %s124
    %p135 = scmp.eq.s32.totalorder %s16, 0
    %p136 = por %p134, %p135
    %p137 = scmp.ne.s32.totalorder %s123, %s124
    %p138 = scmp.eq.s32.totalorder %s17, 7
    %p139 = por %p137, %p138
    %p141 = scmp.ne.s32.totalorder %s124, %s140
    %p142 = scmp.eq.s32.totalorder %s17, 0
    %p143 = por %p141, %p142
    %p144 = scmp.le.s32.totalorder 1, %s11
    %p145 = scmp.lt.s32.totalorder %s11, 9
    %p146 = pnand %p144, %p145
    %p147 = pneg %p146
    // Predicated region
    $region9: #{kann_build_and_reduce.1} parent=5 // pred_check
      _
    $region10: #{kann_build_and_reduce.1} parent=5 // pred_check_branch
      %149 = sbr.rel (%p146) target = $region12
    $region11: #{kann_build_and_reduce.1} parent=5 // pred_region
      %s150 = ssub.s32 %s11, 1
      // Predicated region
      $region13: #{kann_build_and_reduce.1} parent=11 // pred_check
        %p151 = pneg %p58
      $region14: #{kann_build_and_reduce.1} parent=11 // pred_check_branch
        %153 = sbr.rel (%p151) target = $region16
      $region15: #{kann_build_and_reduce.1} parent=11 // pred_region
        _
      $region16: #{kann_build_and_reduce.1} parent=11 // pred_fallthru
        _
    $region12: #{kann_build_and_reduce.1} parent=5 // pred_fallthru
      _
    %p154 = scmp.lt.s32.totalorder %s11, 8
    // Predicated region
    $region17: #{kann_build_and_reduce.1} parent=5 // pred_check
      %p155 = pneg %p154
    $region18: #{kann_build_and_reduce.1} parent=5 // pred_check_branch
      %157 = sbr.rel (%p155) target = $region20
    $region19: #{kann_build_and_reduce.1} parent=5 // pred_region
      // Predicated region
      $region21: #{kann_build_and_reduce.1} parent=19 // pred_check
        %p158 = pneg %p31
      $region22: #{kann_build_and_reduce.1} parent=19 // pred_check_branch
        %160 = sbr.rel (%p158) target = $region24
      $region23: #{kann_build_and_reduce.1} parent=19 // pred_region
        %p161 = scmp.lt.s32.totalorder %s11, 7
        %s162 = scalar_select %p161, %s11, 7
        %s163 = scalar_lea.vmem %s0, %s162
      $region24: #{kann_build_and_reduce.1} parent=19 // pred_fallthru
        _
      // Predicated region
      $region25: #{kann_build_and_reduce.1} parent=19 // pred_check
        %p164 = pneg %p78
      $region26: #{kann_build_and_reduce.1} parent=19 // pred_check_branch
        %166 = sbr.rel (%p164) target = $region28
      $region27: #{kann_build_and_reduce.1} parent=19 // pred_region
        %p167 = scmp.lt.s32.totalorder %s11, 7
        %s168 = scalar_select %p167, %s11, 7
        %s169 = smul.addr %s168, 3
        %s170 = smul.addr %s169, 8
        %s171 = scalar_lea.vmem %s2, %s170
      $region28: #{kann_build_and_reduce.1} parent=19 // pred_fallthru
        _
    $region20: #{kann_build_and_reduce.1} parent=5 // pred_fallthru
      _
    %p172 = scmp.le.s32.totalorder 1, %s11
    %p173 = scmp.lt.s32.totalorder %s11, 9
    %p174 = pnand %p172, %p173
    %p175 = pneg %p174
    // Predicated region
    $region29: #{kann_build_and_reduce.1} parent=5 // pred_check
      _
    $region30: #{kann_build_and_reduce.1} parent=5 // pred_check_branch
      %177 = sbr.rel (%p174) target = $region32
    $region31: #{kann_build_and_reduce.1} parent=5 // pred_region
      %s178 = ssub.s32 %s11, 1
      %p179 = scmp.lt.s32.totalorder %s16, 7
      %s180 = scalar_select %p179, %s16, 7
      %s181 = scalar_lea.vmem %s0, %s180
      %p182 = pneg %p37
      %p183 = pneg %p34
      %p184 = pneg %p58
      %p185 = pneg %p55
      %p186 = scmp.lt.s32.totalorder %s16, 7
      %s187 = scalar_select %p186, %s16, 7
      %s188 = smul.addr %s187, 3
      %s189 = smul.addr %s188, 8
      %s190 = scalar_lea.vmem %s2, %s189
      %p191 = pneg %p84
      %p192 = pneg %p81
      %p193 = pneg %p110
      %p194 = pneg %p107
      %p195 = scmp.lt.s32.totalorder %s16, 7
      %s196 = scalar_select %p195, %s16, 7
      %s197 = smul.addr %s196, 4
      %s198 = scalar_lea.vmem %s3, %s197
      %p199 = pneg %p136
      %p200 = pneg %p133
      %p201 = scmp.lt.s32.totalorder %s16, 7
      %s202 = scalar_select %p201, %s16, 7
      %s203 = smul.addr %s202, 3
      %s204 = smul.addr %s203, 8
      %s205 = scalar_lea.vmem %s4, %s204
      %p206 = scmp.lt.s32.totalorder %s16, 7
      %s207 = scalar_select %p206, %s16, 7
      %s208 = scalar_lea.vmem %s0, %s207
      %p209 = scmp.lt.s32.totalorder %s16, 7
      %s210 = scalar_select %p209, %s16, 7
      %s211 = smul.addr %s210, 3
      %s212 = smul.addr %s211, 8
      %s213 = scalar_lea.vmem %s2, %s212
      %p214 = scmp.lt.s32.totalorder %s16, 7
      %s215 = scalar_select %p214, %s16, 7
      %s216 = smul.addr %s215, 4
      %s217 = scalar_lea.vmem %s3, %s216
      %p218 = scmp.lt.s32.totalorder %s16, 7
      %s219 = scalar_select %p218, %s16, 7
      %s220 = smul.addr %s219, 3
      %s221 = smul.addr %s220, 8
      %s222 = scalar_lea.vmem %s4, %s221
      %v223 = vld [vmem:[%s208] sm:$0x1]
      %v224 = vld [vmem:[%s213] sm:$0xff]
      %v225 = vld [vmem:[%s213 + $0x8] sm:$0xff]
      %v226 = vld [vmem:[%s213 + $0x10] sm:$0xff]
      %v227 = vld [vmem:[%s1] sm:$0xff]
      %v228 = vlaneseq
      %v229 = vand.u32 %v228, 127
      %v230 = vperm.slane %v223, 0
      %v231 = vlaneseq
      %v232 = vshrl.u32 %v231, 7
      %234 = vset.pattern.permute.xlu0 %v232
      %235 = vperm.xlu0 %234, %v230
      %v236 = vpop.permute.xlu0 %235
      %vm237 = vcmp.eq.s32.totalorder %v229, %v236
      %v238 = vsel %vm237, 1, 0
      %v239 = vcvt.s32.f32 %v238
      %241 = vset.pattern.permute.xlu0 0
      %242 = vperm.xlu0 %241, %v224
      %v243 = vpop.permute.xlu0 %242
      %246 = vset.pattern.permute.xlu0 0
      %247 = vperm.xlu0 %246, %v225
      %v248 = vpop.permute.xlu0 %247
      %251 = vset.pattern.permute.xlu0 0
      %252 = vperm.xlu0 %251, %v226
      %v253 = vpop.permute.xlu0 %252
      %v255 = vmul.f32 %v239, %v243
      %v256 = vmul.f32 %v239, %v248
      %v257 = vmul.f32 %v239, %v253
      %v258 = vadd.f32 %v255, 0.0
      %v259 = vadd.f32 %v256, 0.0
      %v260 = vadd.f32 %v257, 0.0
      %v261 = vadd.s32 %v236, 1
      %vm262 = vcmp.eq.s32.totalorder %v229, %v261
      %v263 = vsel %vm262, 1, 0
      %v264 = vcvt.s32.f32 %v263
      %265 = vset.pattern.permute.xlu0 1
      %266 = vperm.xlu0 %265, %v224
      %v267 = vpop.permute.xlu0 %266
      %269 = vset.pattern.permute.xlu0 1
      %270 = vperm.xlu0 %269, %v225
      %v271 = vpop.permute.xlu0 %270
      %273 = vset.pattern.permute.xlu0 1
      %274 = vperm.xlu0 %273, %v226
      %v275 = vpop.permute.xlu0 %274
      %v277 = vmul.f32 %v264, %v267
      %v278 = vmul.f32 %v264, %v271
      %v279 = vmul.f32 %v264, %v275
      %v280 = vadd.f32 %v258, %v277
      %v281 = vadd.f32 %v259, %v278
      %v282 = vadd.f32 %v260, %v279
      %v283 = vadd.s32 %v236, 2
      %vm284 = vcmp.eq.s32.totalorder %v229, %v283
      %v285 = vsel %vm284, 1, 0
      %v286 = vcvt.s32.f32 %v285
      %287 = vset.pattern.permute.xlu0 2
      %288 = vperm.xlu0 %287, %v224
      %v289 = vpop.permute.xlu0 %288
      %291 = vset.pattern.permute.xlu0 2
      %292 = vperm.xlu0 %291, %v225
      %v293 = vpop.permute.xlu0 %292
      %295 = vset.pattern.permute.xlu0 2
      %296 = vperm.xlu0 %295, %v226
      %v297 = vpop.permute.xlu0 %296
      %v299 = vmul.f32 %v286, %v289
      %v300 = vmul.f32 %v286, %v293
      %v301 = vmul.f32 %v286, %v297
      %v302 = vadd.f32 %v280, %v299
      %v303 = vadd.f32 %v281, %v300
      %v304 = vadd.f32 %v282, %v301
      %v305 = vadd.s32 %v236, 3
      %vm306 = vcmp.eq.s32.totalorder %v229, %v305
      %v307 = vsel %vm306, 1, 0
      %v308 = vcvt.s32.f32 %v307
      %309 = vset.pattern.permute.xlu0 3
      %310 = vperm.xlu0 %309, %v224
      %v311 = vpop.permute.xlu0 %310
      %313 = vset.pattern.permute.xlu0 3
      %314 = vperm.xlu0 %313, %v225
      %v315 = vpop.permute.xlu0 %314
      %317 = vset.pattern.permute.xlu0 3
      %318 = vperm.xlu0 %317, %v226
      %v319 = vpop.permute.xlu0 %318
      %v321 = vmul.f32 %v308, %v311
      %v322 = vmul.f32 %v308, %v315
      %v323 = vmul.f32 %v308, %v319
      %v324 = vadd.f32 %v302, %v321
      %v325 = vadd.f32 %v303, %v322
      %v326 = vadd.f32 %v304, %v323
      %v327 = vadd.s32 %v236, 4
      %vm328 = vcmp.eq.s32.totalorder %v229, %v327
      %v329 = vsel %vm328, 1, 0
      %v330 = vcvt.s32.f32 %v329
      %331 = vset.pattern.permute.xlu0 4
      %332 = vperm.xlu0 %331, %v224
      %v333 = vpop.permute.xlu0 %332
      %335 = vset.pattern.permute.xlu0 4
      %336 = vperm.xlu0 %335, %v225
      %v337 = vpop.permute.xlu0 %336
      %339 = vset.pattern.permute.xlu0 4
      %340 = vperm.xlu0 %339, %v226
      %v341 = vpop.permute.xlu0 %340
      %v343 = vmul.f32 %v330, %v333
      %v344 = vmul.f32 %v330, %v337
      %v345 = vmul.f32 %v330, %v341
      %v346 = vadd.f32 %v324, %v343
      %v347 = vadd.f32 %v325, %v344
      %v348 = vadd.f32 %v326, %v345
      %vm349 = vcmask 138240
      %350 = vst.msk [vmem:[%s222] sm:$0xff] %vm349, %v346
      %351 = vst.msk [vmem:[%s222 + $0x8] sm:$0xff] %vm349, %v347
      %352 = vst.msk [vmem:[%s222 + $0x10] sm:$0xff] %vm349, %v348
      %v353 = vmul.f32 %v227, %v346
      %v354 = vmul.f32 %v227, %v347
      %v355 = vmul.f32 %v227, %v348
      %v356 = vsel %vm349, %v353, 0.0
      %357 = vadd.xlane.f32.xlu0 %v356
      %v358 = vpop.xlane.xlu0 %357
      %v359 = vsel %vm349, %v354, 0.0
      %360 = vadd.xlane.f32.xlu0 %v359
      %v361 = vpop.xlane.xlu0 %360
      %v362 = vsel %vm349, %v355, 0.0
      %363 = vadd.xlane.f32.xlu0 %v362
      %v364 = vpop.xlane.xlu0 %363
      %v368 = vperm.slane %v358, %v229
      %v369 = vperm.slane %v361, %v229
      %v370 = vperm.slane %v364, %v229
      %vm371 = vcmask 1041409
      %v372 = vsel %vm371, %v369, %v368
      %vm373 = vcmask 1042434
      %v374 = vsel %vm373, %v370, %v372
      %vm376 = vcmask 59392
      %377 = vst.msk [vmem:[%s217] sm:$0x7] %vm376, %v374
      %p378 = scmp.lt.s32.totalorder %s16, 7
      %s379 = scalar_select %p378, %s16, 7
      %s380 = smul.addr %s379, 4
      %s381 = scalar_lea.vmem %s3, %s380
      %p382 = scmp.lt.s32.totalorder %s16, 7
      %s383 = scalar_select %p382, %s16, 7
      %s384 = smul.addr %s383, 3
      %s385 = smul.addr %s384, 8
      %s386 = scalar_lea.vmem %s4, %s385
      // Predicated region
      $region33: #{kann_build_and_reduce.1} parent=31 // pred_check
        %p387 = pneg %p107
      $region34: #{kann_build_and_reduce.1} parent=31 // pred_check_branch
        %389 = sbr.rel (%p387) target = $region36
      $region35: #{kann_build_and_reduce.1} parent=31 // pred_region
        _
      $region36: #{kann_build_and_reduce.1} parent=31 // pred_fallthru
        _
      // Predicated region
      $region37: #{kann_build_and_reduce.1} parent=31 // pred_check
        %p390 = pneg %p133
      $region38: #{kann_build_and_reduce.1} parent=31 // pred_check_branch
        %392 = sbr.rel (%p390) target = $region40
      $region39: #{kann_build_and_reduce.1} parent=31 // pred_region
        _
      $region40: #{kann_build_and_reduce.1} parent=31 // pred_fallthru
        _
    $region32: #{kann_build_and_reduce.1} parent=5 // pred_fallthru
      _
    %p393 = scmp.le.s32.totalorder 2, %s11
    // Predicated region
    $region41: #{kann_build_and_reduce.1} parent=5 // pred_check
      %p394 = pneg %p393
    $region42: #{kann_build_and_reduce.1} parent=5 // pred_check_branch
      %396 = sbr.rel (%p394) target = $region44
    $region43: #{kann_build_and_reduce.1} parent=5 // pred_region
      %s397 = ssub.s32 %s11, 2
      // Predicated region
      $region45: #{kann_build_and_reduce.1} parent=43 // pred_check
        %p398 = pneg %p113
      $region46: #{kann_build_and_reduce.1} parent=43 // pred_check_branch
        %400 = sbr.rel (%p398) target = $region48
      $region47: #{kann_build_and_reduce.1} parent=43 // pred_region
        %p401 = scmp.lt.s32.totalorder %s17, 7
        %s402 = scalar_select %p401, %s17, 7
        %s403 = smul.addr %s402, 4
        %s404 = scalar_lea.vmem %s3, %s403
      $region48: #{kann_build_and_reduce.1} parent=43 // pred_fallthru
        _
      // Predicated region
      $region49: #{kann_build_and_reduce.1} parent=43 // pred_check
        %p405 = pneg %p139
      $region50: #{kann_build_and_reduce.1} parent=43 // pred_check_branch
        %407 = sbr.rel (%p405) target = $region52
      $region51: #{kann_build_and_reduce.1} parent=43 // pred_region
        %p408 = scmp.lt.s32.totalorder %s17, 7
        %s409 = scalar_select %p408, %s17, 7
        %s410 = smul.addr %s409, 3
        %s411 = smul.addr %s410, 8
        %s412 = scalar_lea.vmem %s4, %s411
      $region52: #{kann_build_and_reduce.1} parent=43 // pred_fallthru
        _
    $region44: #{kann_build_and_reduce.1} parent=5 // pred_fallthru
      _
  $region6: #{kann_build_and_reduce.1} parent=0 // loop_footer
    %s15 = sadd.s32 1, %s11
  $region7: #{kann_build_and_reduce.1} parent=0 // loop_footer_branch
    %10 = sbr.rel target = $region3
  $region8: #{kann_build_and_reduce.1} parent=0 // loop_exit
    _

</llo_original>
